<compile_context>
chip_gen: v6e
topology: v6e:2x2x1
jax: 0.10.0
libtpu: 0.0.40
codegen_flags: <defaults>
</compile_context>

<pallas_src>
import functools
import math
from typing import NamedTuple

import jax
import jax.numpy as jnp
from jax import lax
from jax.experimental import pallas as pl
from jax.experimental.pallas import tpu as pltpu


def _round_up(x, m):
    return ((x + m - 1) // m) * m


def _pick_vmem_limit(vmem_need_bytes):
    cap = 64 << 20                      # conservative default (v7x per-TC VMEM)
    try:
        cap = int(pltpu.get_tpu_info().vmem_capacity_bytes)
    except Exception:
        pass
    # ~25% + 2 MiB headroom above the requirement, ~15% below physical VMEM,
    # never below the default scoped limit.  If the resident scratch no longer
    # fits (very large N on v7x), use smaller tiles / per-layer streaming.
    limit = max(int(1.25 * vmem_need_bytes) + (2 << 20), 32 << 20)
    return min(limit, (cap * 85) // 100)


def _ncl_kernel(x0_ref, a_ref, o_ref, x_buf, acc, part, x0_sem, *,
                n_layers, tm, tk, n_pad, u_pad, u_tiles, inv_a_scale, inv_mean):
    """Fused LGConv stack: x_{l+1} = A @ x_l ; out = mean_l x_l (x0 term added outside)."""
    l = pl.program_id(0)      # layer            (outermost, sequential)
    i = pl.program_id(1)      # output row tile
    k = pl.program_id(2)      # packed K tile    (innermost, reduction)
    nk = pl.num_programs(2)

    # One-time init: DMA x0 (bf16, left in HBM via pl.ANY) into ping-pong slot 0.
    # No pipelined / double-buffered copy of x0 is ever held in VMEM.
    @pl.when((l == 0) & (i == 0) & (k == 0))
    def _():
        cp = pltpu.make_async_copy(x0_ref, x_buf.at[pl.ds(0, n_pad), :], x0_sem)
        cp.start()
        cp.wait()

    # Per-(layer, row-tile) K-reduction accumulator.
    @pl.when(k == 0)
    def _():
        part[...] = jnp.zeros_like(part)

    # Bipartite packing: user row tiles (i < u_tiles) multiply the item half of
    # x, item row tiles multiply the user half.  Packed A columns past the real
    # half are zero padding, so the clamp below only ever hits all-zero tiles.
    cur = lax.rem(l, 2)                               # ping-pong slot holding x_l
    base = jnp.where(i < u_tiles, u_pad, 0)
    koff = jnp.minimum(base + k * tk, n_pad - tk)
    xoff = pl.multiple_of(cur * n_pad + koff, 128)
    x_chunk = x_buf[pl.ds(xoff, tk), :]               # (tk, d_pad) bf16

    # int8 -> bf16 dequant on the VPU (hidden under the A-tile DMA); the global
    # scale is folded into the finalize below.  No-op for bf16 A storage.
    a_tile = a_ref[...].astype(jnp.bfloat16)
    part[...] += jnp.dot(a_tile, x_chunk, preferred_element_type=jnp.float32)

    # Finalize this (layer, row tile): write x_{l+1}, update the layer sum.
    @pl.when(k == nk - 1)
    def _():
        p = part[...]
        if inv_a_scale != 1.0:                        # trace-time constant
            p = p * inv_a_scale
        roff = pl.multiple_of(i * tm, tm)
        nxt = 1 - cur
        woff = pl.multiple_of(nxt * n_pad + roff, 128)
        x_buf[pl.ds(woff, tm), :] = p.astype(x_buf.dtype)       # x_{l+1}
        # acc = x_1 + ... + x_{l+1}  (the x_0 term is added in f32 outside).
        new_acc = jnp.where(l == 0, p, acc[pl.ds(roff, tm), :] + p)
        acc[pl.ds(roff, tm), :] = new_acc

    # HBM writeback only on the last layer (lane-dense (tm, d_pad) store).
    # Correctness relies on l being the outermost grid axis (final writeback of
    # each output block happens after this store).
    @pl.when((k == nk - 1) & (l == n_layers - 1))
    def _():
        roff = pl.multiple_of(i * tm, tm)
        o_ref[...] = (acc[pl.ds(roff, tm), :] * inv_mean).astype(o_ref.dtype)


class PackedAdjacency(NamedTuple):
    a: jax.Array          # (n_pad, khalf) int8 / bf16, bipartite-packed
    inv_a_scale: float    # dequant scale folded in-kernel (1.0 for bf16)
    num_users: int
    num_items: int
    u_pad: int
    i_pad: int
    khalf: int
    tm: int
    tk: int


def build_normalized_adjacency(edge_index, num_users, num_items, *,
                               tm=256, tk=4096, a_dtype=jnp.int8):
    """Build the symmetrically-normalised interaction adjacency ONCE (cache it).

    The user-item graph is bipartite, so only the user->item and item->user
    blocks are stored ("packed" layout): row r < u_pad holds A[user r, items],
    row u_pad + r holds A[item r, users].  Weights are 1/sqrt(deg_src*deg_dst)
    (LGConv gcn_norm, no self-loops).

    Per-generation tile guidance (A-tile bytes >= ~2 MiB so the ~0.35us
    per-grid-step overhead is amortised against the HBM DMA):
      v5e : tm=128..256, tk>=2048
      v6e : tm=512,      tk=2048..4096
      v7x : tm=1024,     tk=2048..4096  (and re-check the 64 MiB VMEM budget)
    lcm(tm, tk) sets the per-side row padding; keep it small relative to
    num_users / num_items so padded A traffic stays within a few percent.
    """
    assert tm % 128 == 0 and tk % 128 == 0, "tiles must be MXU/lane aligned"
    lcm = tm * tk // math.gcd(tm, tk)
    u_pad = _round_up(max(num_users, 1), lcm)
    i_pad = _round_up(max(num_items, 1), lcm)
    khalf = max(u_pad, i_pad)
    n_pad = u_pad + i_pad

    src = edge_index[0].astype(jnp.int32)
    dst = edge_index[1].astype(jnp.int32)
    n = num_users + num_items
    deg = jnp.zeros((n,), jnp.float32).at[dst].add(1.0)
    dis = jnp.where(deg > 0.0, lax.rsqrt(deg), 0.0)
    w = dis[src] * dis[dst]

    # Packed scatter.  Assumes a bipartite edge set (user<->item only, both
    # directions present), which is what NCL / LightGCN interaction graphs are.
    # TODO(synk): general non-bipartite edge_index needs the dense layout (or a
    # blocked-CSR sparse SpMM).
    dst_is_user = dst < num_users
    prow = jnp.where(dst_is_user, dst, u_pad + (dst - num_users))
    pcol = jnp.where(dst_is_user, src - num_users, src)
    a_packed = jnp.zeros((n_pad, khalf), jnp.float32).at[prow, pcol].add(w)

    if jnp.dtype(a_dtype) == jnp.int8:
        # Global-scale int8; dequant scale folded into the kernel finalize.
        max_w = float(jnp.max(a_packed))
        scale = 127.0 / max_w if max_w > 0.0 else 1.0
        a_store = jnp.clip(jnp.round(a_packed * scale), -127, 127).astype(jnp.int8)
        inv_a_scale = 1.0 / scale
    else:
        a_store = a_packed.astype(a_dtype)
        inv_a_scale = 1.0

    return PackedAdjacency(a_store, float(inv_a_scale), num_users, num_items,
                           u_pad, i_pad, khalf, tm, tk)


def ncl_propagate(user_emb, item_emb, adj: PackedAdjacency, *, n_layers=3):
    """Fused LGConv stack + layer mean.  Returns (user_out, item_out)."""
    assert n_layers >= 1
    num_users, d = user_emb.shape
    num_items = item_emb.shape[0]
    assert num_users == adj.num_users and num_items == adj.num_items
    tm, tk = adj.tm, adj.tk
    u_pad, i_pad, khalf = adj.u_pad, adj.i_pad, adj.khalf
    n_pad = u_pad + i_pad
    d_pad = _round_up(d, 128)        # lane-dense stores

    # x0 in the padded node layout: users at rows [0, u_pad), items at
    # [u_pad, u_pad+num_items).  Only a bf16 copy goes to the kernel (DMA'd
    # once); the exact f32 x0 term of the mean is added outside the kernel.
    x0_bf16 = jnp.zeros((n_pad, d_pad), jnp.bfloat16)
    x0_bf16 = x0_bf16.at[:num_users, :d].set(user_emb.astype(jnp.bfloat16))
    x0_bf16 = x0_bf16.at[u_pad:u_pad + num_items, :d].set(item_emb.astype(jnp.bfloat16))

    a_bytes = jnp.dtype(adj.a.dtype).itemsize
    grid = (n_layers, n_pad // tm, khalf // tk)

    # Resident scratch + double-buffered streams (x0 stays in HBM via pl.ANY).
    vmem_need = (2 * n_pad * d_pad * 2        # x ping-pong (bf16)
                 + n_pad * d_pad * 4          # layer-sum accumulator (f32)
                 + tm * d_pad * 4             # per-row-tile K accumulator (f32)
                 + 2 * tm * tk * a_bytes      # double-buffered A tiles
                 + 2 * tm * d_pad * 4)        # double-buffered output tiles
    vmem_limit = _pick_vmem_limit(vmem_need)

    kernel = functools.partial(
        _ncl_kernel, n_layers=n_layers, tm=tm, tk=tk, n_pad=n_pad, u_pad=u_pad,
        u_tiles=u_pad // tm, inv_a_scale=float(adj.inv_a_scale),
        inv_mean=1.0 / float(n_layers + 1))

    out = pl.pallas_call(
        kernel,
        out_shape=jax.ShapeDtypeStruct((n_pad, d_pad), jnp.float32),
        grid_spec=pltpu.PrefetchScalarGridSpec(
            num_scalar_prefetch=0,
            grid=grid,
            in_specs=[
                pl.BlockSpec(memory_space=pl.ANY),                 # x0: HBM, DMA'd once
                pl.BlockSpec((tm, tk), lambda l, i, k: (i, k)),    # A: streamed tiles
            ],
            out_specs=pl.BlockSpec((tm, d_pad), lambda l, i, k: (i, 0)),
            scratch_shapes=[
                pltpu.VMEM((2 * n_pad, d_pad), jnp.bfloat16),      # x ping-pong
                pltpu.VMEM((n_pad, d_pad), jnp.float32),           # layer-sum acc
                pltpu.VMEM((tm, d_pad), jnp.float32),              # K accumulator
                pltpu.SemaphoreType.DMA,                           # x0 copy sem
            ],
        ),
        compiler_params=pltpu.CompilerParams(
            # x / acc are carried in VMEM scratch across all axes -> sequential.
            # TODO(synk): v7x dual-TC: per-layer pallas_calls with a "parallel"
            # row axis (or core_map + VMEM_SHARED) to stream A from both cores.
            dimension_semantics=("arbitrary", "arbitrary", "arbitrary"),
            vmem_limit_bytes=vmem_limit,
        ),
    )(x0_bf16, adj.a)

    inv_mean = 1.0 / float(n_layers + 1)
    users = out[:num_users, :d] + user_emb.astype(jnp.float32) * inv_mean
    items = out[u_pad:u_pad + num_items, :d] + item_emb.astype(jnp.float32) * inv_mean
    return users, items


def ncl_forward(user_emb, item_emb, edge_index, *, n_layers=3, tm=256, tk=4096,
                a_dtype=jnp.int8):
    """Convenience wrapper (builds A every call — prefer caching the adjacency)."""
    adj = build_normalized_adjacency(edge_index, user_emb.shape[0],
                                     item_emb.shape[0], tm=tm, tk=tk,
                                     a_dtype=a_dtype)
    return ncl_propagate(user_emb, item_emb, adj, n_layers=n_layers)


def _xavier_uniform(key, shape):
    # nn.init.xavier_uniform_ on a 2D weight: fan_out = shape[0], fan_in = shape[1]
    fan_out, fan_in = shape
    bound = (6.0 / (fan_in + fan_out)) ** 0.5
    return jax.random.uniform(key, shape, jnp.float32, -bound, bound)


def _reference_forward(user_emb, item_emb, edge_index, *, n_layers=3):
    """Pure-JAX f32 dense reference (does NOT use the bipartite packing)."""
    num_users = user_emb.shape[0]
    n = num_users + item_emb.shape[0]
    x = jnp.concatenate([user_emb, item_emb], axis=0).astype(jnp.float32)
    src, dst = edge_index[0], edge_index[1]
    deg = jnp.zeros((n,), jnp.float32).at[dst].add(1.0)
    dis = jnp.where(deg > 0.0, lax.rsqrt(deg), 0.0)
    a = jnp.zeros((n, n), jnp.float32).at[dst, src].add(dis[src] * dis[dst])
    all_x = [x]
    for _ in range(n_layers):
        x = a @ x
        all_x.append(x)
    xm = jnp.stack(all_x, axis=1).mean(axis=1)
    return xm[:num_users], xm[num_users:]


if __name__ == "__main__":
    num_users, num_items, embedding_size, n_layers = 200, 184, 64, 3

    key = jax.random.PRNGKey(0)
    ku, ki = jax.random.split(key)
    user_w = _xavier_uniform(ku, (num_users, embedding_size))
    item_w = _xavier_uniform(ki, (num_items, embedding_size))

    # Deterministic bipartite interaction graph (both edge directions, as in a
    # typical NCL / LightGCN edge_index over the joint user+item node set).
    u = jnp.arange(num_users, dtype=jnp.int32)
    it1 = (u * 3) % num_items
    it2 = (u + 1) % num_items
    src = jnp.concatenate([u, it1 + num_users, u, it2 + num_users])
    dst = jnp.concatenate([it1 + num_users, u, it2 + num_users, u])
    edge_index = jnp.stack([src, dst], axis=0)

    # Small tiles so the toy grid (3 layers x 4 row tiles x 2 K tiles) is
    # actually exercised; production sizes per-generation are documented in
    # build_normalized_adjacency.  A is built once (cache) and stored int8.
    adj = build_normalized_adjacency(edge_index, num_users, num_items,
                                     tm=128, tk=128, a_dtype=jnp.int8)
    users_out, items_out = ncl_propagate(user_w, item_w, adj, n_layers=n_layers)
    jax.block_until_ready((users_out, items_out))

    ref_u, ref_i = _reference_forward(user_w, item_w, edge_index, n_layers=n_layers)
    assert users_out.shape == (num_users, embedding_size)
    assert items_out.shape == (num_items, embedding_size)
    # int8 A (global scale) + bf16 inter-layer x with f32 accumulation.
    assert jnp.allclose(users_out, ref_u, atol=2e-2, rtol=2e-2)
    assert jnp.allclose(items_out, ref_i, atol=2e-2, rtol=2e-2)

    print("KERNEL_OK")
</pallas_src>

<mosaic_0001>
module attributes {stable_mosaic.version = 11 : i64} {
  func.func @_ncl_kernel(%arg0: i32, %arg1: i32, %arg2: i32, %arg3: memref<512x128xbf16, #tpu.memory_space<any>>, %arg4: memref<128x128xi8, #tpu.memory_space<vmem>>, %arg5: memref<128x128xf32, #tpu.memory_space<vmem>>, %arg6: memref<1024x128xbf16, #tpu.memory_space<vmem>>, %arg7: memref<512x128xf32, #tpu.memory_space<vmem>>, %arg8: memref<128x128xf32, #tpu.memory_space<vmem>>, %arg9: memref<!tpu.dma_semaphore, #tpu.memory_space<semaphore_mem>>) attributes {dimension_semantics = [#tpu.dimension_semantics<arbitrary>, #tpu.dimension_semantics<arbitrary>, #tpu.dimension_semantics<arbitrary>], iteration_bounds = array<i64: 3, 4, 2>, scalar_prefetch = 0 : i64, scratch_operands = 4 : i64, tpu.core_type = #tpu.core_type<tc>, window_params = [{}, {transform_indices = @transform_1, window_bounds = array<i64: 128, 128>}, {transform_indices = @transform_2, window_bounds = array<i64: 128, 128>}]} {
    %c0_i32 = arith.constant 0 : i32
    %0 = arith.cmpi eq, %arg0, %c0_i32 : i32
    %c0_i32_0 = arith.constant 0 : i32
    %1 = arith.cmpi eq, %arg1, %c0_i32_0 : i32
    %2 = arith.andi %0, %1 : i1
    %c0_i32_1 = arith.constant 0 : i32
    %3 = arith.cmpi eq, %arg2, %c0_i32_1 : i32
    %4 = arith.andi %2, %3 : i1
    %5 = arith.extui %4 : i1 to i32
    %c0_i32_2 = arith.constant 0 : i32
    %6 = arith.cmpi ne, %5, %c0_i32_2 : i32
    scf.if %6 {
      %c0_i32_17 = arith.constant 0 : i32
      %c0_i32_18 = arith.constant 0 : i32
      %35 = tpu.memref_slice %arg6[%c0_i32_17, %c0_i32_18] : memref<1024x128xbf16, #tpu.memory_space<vmem>> -> memref<512x128xbf16, #tpu.memory_space<vmem>>
      tpu.enqueue_dma source(%arg3 : memref<512x128xbf16, #tpu.memory_space<any>>) target(%35 : memref<512x128xbf16, #tpu.memory_space<vmem>>) target_semaphore(%arg9 : memref<!tpu.dma_semaphore, #tpu.memory_space<semaphore_mem>>)
      %c0_i32_19 = arith.constant 0 : i32
      %c0_i32_20 = arith.constant 0 : i32
      %36 = tpu.memref_slice %arg6[%c0_i32_19, %c0_i32_20] : memref<1024x128xbf16, #tpu.memory_space<vmem>> -> memref<512x128xbf16, #tpu.memory_space<vmem>>
      tpu.wait_dma2 semaphore(%arg9 : memref<!tpu.dma_semaphore, #tpu.memory_space<semaphore_mem>>) src(%arg3 : memref<512x128xbf16, #tpu.memory_space<any>>) dst(%36 : memref<512x128xbf16, #tpu.memory_space<vmem>>)
    } else {
    }
    %c0_i32_3 = arith.constant 0 : i32
    %7 = arith.cmpi eq, %arg2, %c0_i32_3 : i32
    %8 = arith.extui %7 : i1 to i32
    %c0_i32_4 = arith.constant 0 : i32
    %9 = arith.cmpi ne, %8, %c0_i32_4 : i32
    scf.if %9 {
      %cst_17 = arith.constant 0.000000e+00 : f32
      %35 = vector.broadcast %cst_17 : f32 to vector<128x128xf32>
      %c0_18 = arith.constant 0 : index
      %c0_19 = arith.constant 0 : index
      %36 = vector.load %arg8[%c0_18, %c0_19] : memref<128x128xf32, #tpu.memory_space<vmem>>, vector<128x128xf32>
      tpu.vector_store %arg8[%c0_18, %c0_19], %35 {strides = array<i32>} : memref<128x128xf32, #tpu.memory_space<vmem>>, vector<128x128xf32>,
    } else {
    }
    %c2_i32 = arith.constant 2 : i32
    %10 = arith.remsi %arg0, %c2_i32 : i32
    %c2_i32_5 = arith.constant 2 : i32
    %11 = arith.cmpi slt, %arg1, %c2_i32_5 : i32
    %c256_i32 = arith.constant 256 : i32
    %c0_i32_6 = arith.constant 0 : i32
    %12 = arith.select %11, %c256_i32, %c0_i32_6 : i32
    %c128_i32 = arith.constant 128 : i32
    %13 = arith.muli %arg2, %c128_i32 : i32
    %14 = arith.addi %12, %13 : i32
    %c384_i32 = arith.constant 384 : i32
    %15 = arith.minsi %14, %c384_i32 : i32
    %c512_i32 = arith.constant 512 : i32
    %16 = arith.muli %10, %c512_i32 : i32
    %17 = arith.addi %16, %15 : i32
    %18 = tpu.assume_multiple %17, 128 : i32
    %19 = arith.index_cast %18 : i32 to index
    %c0 = arith.constant 0 : index
    %20 = vector.load %arg6[%19, %c0] : memref<1024x128xbf16, #tpu.memory_space<vmem>>, vector<128x128xbf16>
    %c0_7 = arith.constant 0 : index
    %c0_8 = arith.constant 0 : index
    %21 = vector.load %arg4[%c0_7, %c0_8] : memref<128x128xi8, #tpu.memory_space<vmem>>, vector<128x128xi8>
    %22 = arith.sitofp %21 : vector<128x128xi8> to vector<128x128xbf16>
    %c0_9 = arith.constant 0 : index
    %c0_10 = arith.constant 0 : index
    %23 = vector.load %arg8[%c0_9, %c0_10] : memref<128x128xf32, #tpu.memory_space<vmem>>, vector<128x128xf32>
    %cst = arith.constant dense<0.000000e+00> : vector<128x128xf32>
    %24 = tpu.matmul %22, %20, %cst {dimension_numbers = #tpu.dot_dimension_numbers<[1], [0], [0], [1], [0, 0, 1, 1], [], []>} : vector<128x128xbf16>, vector<128x128xbf16>, vector<128x128xf32> -> vector<128x128xf32>
    %25 = arith.addf %23, %24 : vector<128x128xf32>
    %c0_11 = arith.constant 0 : index
    %c0_12 = arith.constant 0 : index
    %26 = vector.load %arg8[%c0_11, %c0_12] : memref<128x128xf32, #tpu.memory_space<vmem>>, vector<128x128xf32>
    tpu.vector_store %arg8[%c0_11, %c0_12], %25 {strides = array<i32>} : memref<128x128xf32, #tpu.memory_space<vmem>>, vector<128x128xf32>,
    %c1_i32 = arith.constant 1 : i32
    %27 = arith.cmpi eq, %arg2, %c1_i32 : i32
    %28 = arith.extui %27 : i1 to i32
    %c0_i32_13 = arith.constant 0 : i32
    %29 = arith.cmpi ne, %28, %c0_i32_13 : i32
    scf.if %29 {
      %c0_17 = arith.constant 0 : index
      %c0_18 = arith.constant 0 : index
      %35 = vector.load %arg8[%c0_17, %c0_18] : memref<128x128xf32, #tpu.memory_space<vmem>>, vector<128x128xf32>
      %cst_19 = arith.constant 0.00393700786 : f32
      %36 = vector.broadcast %cst_19 : f32 to vector<128x128xf32>
      %37 = arith.mulf %35, %36 : vector<128x128xf32>
      %c128_i32_20 = arith.constant 128 : i32
      %38 = arith.muli %arg1, %c128_i32_20 : i32
      %39 = tpu.assume_multiple %38, 128 : i32
      %c1_i32_21 = arith.constant 1 : i32
      %40 = arith.subi %c1_i32_21, %10 : i32
      %c512_i32_22 = arith.constant 512 : i32
      %41 = arith.muli %40, %c512_i32_22 : i32
      %42 = arith.addi %41, %39 : i32
      %43 = tpu.assume_multiple %42, 128 : i32
      %44 = arith.truncf %37 : vector<128x128xf32> to vector<128x128xbf16>
      %45 = arith.index_cast %43 : i32 to index
      %c0_23 = arith.constant 0 : index
      %46 = vector.load %arg6[%45, %c0_23] : memref<1024x128xbf16, #tpu.memory_space<vmem>>, vector<128x128xbf16>
      tpu.vector_store %arg6[%45, %c0_23], %44 {strides = array<i32>} : memref<1024x128xbf16, #tpu.memory_space<vmem>>, vector<128x128xbf16>,
      %c0_i32_24 = arith.constant 0 : i32
      %47 = arith.cmpi eq, %arg0, %c0_i32_24 : i32
      %48 = arith.index_cast %39 : i32 to index
      %c0_25 = arith.constant 0 : index
      %49 = vector.load %arg7[%48, %c0_25] : memref<512x128xf32, #tpu.memory_space<vmem>>, vector<128x128xf32>
      %50 = arith.addf %49, %37 : vector<128x128xf32>
      %51 = arith.select %47, %37, %50 : vector<128x128xf32>
      %52 = arith.index_cast %39 : i32 to index
      %c0_26 = arith.constant 0 : index
      %53 = vector.load %arg7[%52, %c0_26] : memref<512x128xf32, #tpu.memory_space<vmem>>, vector<128x128xf32>
      tpu.vector_store %arg7[%52, %c0_26], %51 {strides = array<i32>} : memref<512x128xf32, #tpu.memory_space<vmem>>, vector<128x128xf32>,
    } else {
    }
    %c1_i32_14 = arith.constant 1 : i32
    %30 = arith.cmpi eq, %arg2, %c1_i32_14 : i32
    %c2_i32_15 = arith.constant 2 : i32
    %31 = arith.cmpi eq, %arg0, %c2_i32_15 : i32
    %32 = arith.andi %30, %31 : i1
    %33 = arith.extui %32 : i1 to i32
    %c0_i32_16 = arith.constant 0 : i32
    %34 = arith.cmpi ne, %33, %c0_i32_16 : i32
    scf.if %34 {
      %c128_i32_17 = arith.constant 128 : i32
      %35 = arith.muli %arg1, %c128_i32_17 : i32
      %36 = tpu.assume_multiple %35, 128 : i32
      %37 = arith.index_cast %36 : i32 to index
      %c0_18 = arith.constant 0 : index
      %38 = vector.load %arg7[%37, %c0_18] : memref<512x128xf32, #tpu.memory_space<vmem>>, vector<128x128xf32>
      %cst_19 = arith.constant 2.500000e-01 : f32
      %39 = vector.broadcast %cst_19 : f32 to vector<128x128xf32>
      %40 = arith.mulf %38, %39 : vector<128x128xf32>
      %c0_20 = arith.constant 0 : index
      %c0_21 = arith.constant 0 : index
      %41 = vector.load %arg5[%c0_20, %c0_21] : memref<128x128xf32, #tpu.memory_space<vmem>>, vector<128x128xf32>
      tpu.vector_store %arg5[%c0_20, %c0_21], %40 {strides = array<i32>} : memref<128x128xf32, #tpu.memory_space<vmem>>, vector<128x128xf32>,
    } else {
    }
    return
  }
  func.func @transform_1(%arg0: i32, %arg1: i32, %arg2: i32) -> (i32, i32) {
    %c0_i32 = arith.constant 0 : i32
    return %arg1, %arg2 : i32, i32
  }
  func.func @transform_2(%arg0: i32, %arg1: i32, %arg2: i32) -> (i32, i32) {
    %c0_i32 = arith.constant 0 : i32
    %c0_i32_0 = arith.constant 0 : i32
    return %arg1, %c0_i32 : i32, i32
  }
}

</mosaic_0001>

<llo_original>
// kernel: tpu_custom_call.1
$region0: #{tpu_custom_call.1}
  #allocation0 [shape = 'u32[]', space=smem, size = 0x4, offset = 0x4, fixed_abs, tag = 'smem constant byte address 0x4 - core index']
  #allocation1 [shape = 'u32[144,128]{1,0:T(1,128)}', space=vmem, size = 0x12000, scoped, tag = 'internal scratch']
  #allocation2 [shape = 'bf16[1024,128]{1,0:T(8,128)(2,1)}', space=vmem, size = 0x40000, scoped, tag = 'scratch operand']
  #allocation3 [shape = 'f32[512,128]{1,0:T(8,128)}', space=vmem, size = 0x40000, scoped, tag = 'scratch operand']
  #allocation4 [shape = 'f32[128,128]{1,0:T(8,128)}', space=vmem, size = 0x10000, scoped, tag = 'scratch operand']
  #allocation5 [shape = 's32[1]{0}', space=sflag, size = 0x4, scoped, tag = 'scratch operand']
  #allocation10 [shape = 's32[]', space=sflag, size = 0x4, offset = 0, fixed_abs, tag = 'sflag constant byte address 0x0 - dummy sync flag']
  #allocation11 [shape = 's32[]', space=sflag, size = 0x4, offset = 0, fixed_abs, tag = 'sflag constant byte address 0x0 - dummy sync flag']
  #allocation12 [shape = 'u32[]', space=smem, size = 0x4, offset = 0x44, fixed_abs, tag = 'smem constant byte address 0x44 - assertion arg 0']
  #allocation13 [shape = 'u32[]', space=smem, size = 0x4, offset = 0x48, fixed_abs, tag = 'smem constant byte address 0x48 - assertion arg 1']
  %s0 = inlined_call_operand.hbm [shape: bf16[512,128], index: 0, kind: input, shape index: {}]
  %s1 = inlined_call_operand.hbm [shape: s8[512,256], index: 1, kind: input, shape index: {}]
  %s2 = inlined_call_operand.hbm [shape: f32[512,128], index: 2, kind: output, shape index: {}]
  %s3 = sld [smem:[#allocation0]]
  $region61: #{tpu_custom_call.1} parent=0
    _
  %s5 = ssub.s32 1, %s3
  %s6 = scalar_select 0, %s5, %s3
  $region1: #{tpu_custom_call.1} parent=0
    #allocation6 [shape = 'u8[32768]{0}', space=vmem, size = 0x8000, scoped, tag = 'input window, operand 1']
    #allocation7 [shape = 's32[2]{0}', space=sflag, size = 0x8, scoped, tag = 'scoped memory for tpu_custom_call.1']
    #allocation8 [shape = 's32[2]{0}', space=sflag, size = 0x8, scoped, tag = 'scoped memory for tpu_custom_call.1']
    #allocation9 [shape = 'u8[131072]{0}', space=vmem, size = 0x20000, scoped, tag = 'output window, operand 0']
    %7 = vsyncpa [#allocation7], 0
    %s8 = scalar_lea.sflag [#allocation7], 1
    %9 = vsyncpa %s8, 0
    %10 = vsyncpa [#allocation8], 0
    %s11 = scalar_lea.sflag [#allocation8], 1
    %12 = vsyncpa %s11, 0
    loop: start=0, step=1, limit=26
    $region2: #{tpu_custom_call.1} parent=1 // loop_pre_header
      _
    $region3: #{tpu_custom_call.1} parent=1 // loop_header
      %s14 = sphi 0, %s18
      %p15 = scmp.ge.s32.totalorder %s14, 26
      %s21 = sphi 0, %s40
      %s22 = sphi 0, %s36
      %s23 = sphi 0, %s32
      %s24 = sphi 0, %s21
      %s25 = sphi 0, %s22
      %s26 = sphi 0, %s23
      %s27 = sphi 0, %s24
      %s28 = sphi 0, %s25
      %s29 = sphi 0, %s26
      %s45 = sphi 0, %s47
      %s48 = sphi 0, %s45
      %s49 = sphi 0, %s48
      %s65 = sphi 0, %s49
      %s71 = sphi 0, %s73
      %s74 = sphi 0, %s71
      %s75 = sphi 0, %s74
      %s91 = sphi 0, %s75
    $region4: #{tpu_custom_call.1} parent=1 // loop_header_branch
      %17 = sbr.rel (%p15) target = $region8
    $region5: #{tpu_custom_call.1} parent=1 // loop_body
      %s19 = ssub.s32 %s14, 1
      %s20 = ssub.s32 %s14, 2
      %s30 = sadd.s32 1, %s23
      %p31 = scmp.ge.s32.totalorder %s30, 2
      %s32 = scalar_select %p31, 0, %s30
      %s33 = sadd.s32 1, %s22
      %s34 = scalar_select %p31, %s33, %s22
      %p35 = scmp.ge.s32.totalorder %s34, 4
      %s36 = scalar_select %p35, 0, %s34
      %s37 = sadd.s32 1, %s21
      %s38 = scalar_select %p35, %s37, %s21
      %p39 = scmp.ge.s32.totalorder %s38, 3
      %s40 = scalar_select %p39, 0, %s38
      %s41 = ssub.s32 %s22, %s36
      %s42 = ssub.s32 %s23, %s32
      %s43 = sor.u32 %s41, %s42
      %p44 = scmp.eq.s32.totalorder %s43, 0
      %s46 = sadd.s32 %s45, 1
      %s47 = scalar_select %p44, %s45, %s46
      %p50 = pneg %p44
      %p51 = scmp.eq.s32.totalorder %s14, 23
      %p52 = por %p50, %p51
      %p53 = scmp.ne.s32.totalorder %s45, %s48
      %p54 = scmp.eq.s32.totalorder %s14, 0
      %p55 = por %p53, %p54
      %p56 = scmp.ne.s32.totalorder %s45, %s48
      %p57 = scmp.eq.s32.totalorder %s19, 23
      %p58 = por %p56, %p57
      %p59 = scmp.ne.s32.totalorder %s48, %s49
      %p60 = scmp.eq.s32.totalorder %s19, 0
      %p61 = por %p59, %p60
      %p62 = scmp.ne.s32.totalorder %s48, %s49
      %p63 = scmp.eq.s32.totalorder %s20, 23
      %p64 = por %p62, %p63
      %p66 = scmp.ne.s32.totalorder %s49, %s65
      %p67 = scmp.eq.s32.totalorder %s20, 0
      %p68 = por %p66, %p67
      %s69 = ssub.s32 %s22, %s36
      %p70 = scmp.eq.s32.totalorder %s69, 0
      %s72 = sadd.s32 %s71, 1
      %s73 = scalar_select %p70, %s71, %s72
      %p76 = pneg %p70
      %p77 = scmp.eq.s32.totalorder %s14, 23
      %p78 = por %p76, %p77
      %p79 = scmp.ne.s32.totalorder %s71, %s74
      %p80 = scmp.eq.s32.totalorder %s14, 0
      %p81 = por %p79, %p80
      %p82 = scmp.ne.s32.totalorder %s71, %s74
      %p83 = scmp.eq.s32.totalorder %s19, 23
      %p84 = por %p82, %p83
      %p85 = scmp.ne.s32.totalorder %s74, %s75
      %p86 = scmp.eq.s32.totalorder %s19, 0
      %p87 = por %p85, %p86
      %p88 = scmp.ne.s32.totalorder %s74, %s75
      %p89 = scmp.eq.s32.totalorder %s20, 23
      %p90 = por %p88, %p89
      %p92 = scmp.ne.s32.totalorder %s75, %s91
      %p93 = scmp.eq.s32.totalorder %s20, 0
      %p94 = por %p92, %p93
      %p95 = scmp.le.s32.totalorder 1, %s14
      %p96 = scmp.lt.s32.totalorder %s14, 25
      %p97 = pnand %p95, %p96
      %p98 = pneg %p97
      // Predicated region
      $region9: #{tpu_custom_call.1} parent=5 // pred_check
        _
      $region10: #{tpu_custom_call.1} parent=5 // pred_check_branch
        %100 = sbr.rel (%p97) target = $region12
      $region11: #{tpu_custom_call.1} parent=5 // pred_region
        %s101 = ssub.s32 %s14, 1
      $region12: #{tpu_custom_call.1} parent=5 // pred_fallthru
        _
      %p102 = scmp.lt.s32.totalorder %s14, 24
      // Predicated region
      $region13: #{tpu_custom_call.1} parent=5 // pred_check
        %p103 = pneg %p102
      $region14: #{tpu_custom_call.1} parent=5 // pred_check_branch
        %105 = sbr.rel (%p103) target = $region16
      $region15: #{tpu_custom_call.1} parent=5 // pred_region
        // Predicated region
        $region17: #{tpu_custom_call.1} parent=15 // pred_check
          %p106 = pneg %p55
        $region18: #{tpu_custom_call.1} parent=15 // pred_check_branch
          %108 = sbr.rel (%p106) target = $region20
        $region19: #{tpu_custom_call.1} parent=15 // pred_region
          %s109 = sand.u32 %s45, 1
          %s110 = scalar_lea.sflag [#allocation7], %s109
          %s111 = sand.u32 %s45, 1
          %s112 = smul.addr %s111, 32
          %s113 = scalar_lea.vmem [#allocation6], %s112
          %s114 = smul.u32 4, %s22
          %s116 = ssub.s32 512, 512
          %117 = vsyncadd %s110, %s116
          %s118 = smul.addr %s114, 2
          %s119 = sadd.s32 %s23, %s118
          %s120 = smul.addr %s119, 128
          %s121 = scalar_lea.hbm %s1, %s120
          %s122 = sshll.u32 %s113, 4
          %s123 = int_to_ptr.vmem [resolvable:$true] %s122
          %128 = dma.hbm_to_vmem [thread:$0]  %s121, 512, %s123, %s110, 256, 128, 8
        $region20: #{tpu_custom_call.1} parent=15 // pred_fallthru
          _
      $region16: #{tpu_custom_call.1} parent=5 // pred_fallthru
        _
      %p129 = scmp.le.s32.totalorder 1, %s14
      %p130 = scmp.lt.s32.totalorder %s14, 25
      %p131 = pnand %p129, %p130
      %p132 = pneg %p131
      // Predicated region
      $region21: #{tpu_custom_call.1} parent=5 // pred_check
        _
      $region22: #{tpu_custom_call.1} parent=5 // pred_check_branch
        %134 = sbr.rel (%p131) target = $region24
      $region23: #{tpu_custom_call.1} parent=5 // pred_region
        %s135 = ssub.s32 %s14, 1
        %s136 = sand.u32 %s48, 1
        %s137 = scalar_lea.sflag [#allocation7], %s136
        %s138 = sand.u32 %s48, 1
        %s139 = smul.addr %s138, 32
        %s140 = scalar_lea.vmem [#allocation6], %s139
        // Predicated region
        $region25: #{tpu_custom_call.1} parent=23 // pred_check
          %p141 = pneg %p61
        $region26: #{tpu_custom_call.1} parent=23 // pred_check_branch
          %143 = sbr.rel (%p141) target = $region28
        $region27: #{tpu_custom_call.1} parent=23 // pred_region
          %144 = dma.done %s137, 512
        $region28: #{tpu_custom_call.1} parent=23 // pred_fallthru
          _
        %s145 = sand.u32 %s48, 1
        %s146 = scalar_lea.sflag [#allocation7], %s145
        %s147 = sand.u32 %s48, 1
        %s148 = smul.addr %s147, 32
        %s149 = scalar_lea.vmem [#allocation6], %s148
        %p150 = pneg %p61
        %p151 = pneg %p58
        %p152 = pneg %p87
        %p153 = pneg %p84
        %s154 = sand.u32 %s74, 1
        %s155 = scalar_lea.sflag [#allocation8], %s154
        %s156 = sand.u32 %s74, 1
        %s157 = smul.addr %s156, 128
        %s158 = scalar_lea.vmem [#allocation9], %s157
        %s159 = smul.u32 4, %s25
        %s160 = smul.u32 16, %s25
        %p162 = scmp.eq.s32.totalorder %s24, 0
        %p163 = scmp.eq.s32.totalorder %s25, 0
        %p164 = pnand %p162, %p163
        %p165 = pneg %p164
        %p166 = scmp.eq.s32.totalorder %s26, 0
        %p167 = pnand %p165, %p166
        %p168 = pneg %p167
        // Predicated region
        $region29: #{tpu_custom_call.1} parent=23 // pred_check
          _
        $region30: #{tpu_custom_call.1} parent=23 // pred_check_branch
          %170 = sbr.rel (%p167) target = $region32
        $region31: #{tpu_custom_call.1} parent=23 // pred_region
          // Predicated region
          $region33: #{tpu_custom_call.1} parent=31 // pred_check
            _
          $region34: #{tpu_custom_call.1} parent=31 // pred_check_branch
            %172 = sbr.rel target = $region36
          $region35: #{tpu_custom_call.1} parent=31 // pred_region
            %173 = sst [smem:[#allocation12]] [#allocation11]
            %174 = sst [smem:[#allocation13]] [#allocation10]
          $region36: #{tpu_custom_call.1} parent=31 // pred_fallthru
            _
          %176 = shalt.err (0)
          %s178 = sshll.u32 [#allocation2], 4
          %s179 = int_to_ptr.vmem [resolvable:$true] %s178
          %181 = dma.hbm_to_vmem [thread:$0]  %s0, 4096, %s179, [#allocation5]
          %s182 = smul.u32 4, 64
          %s183 = smul.u32 %s182, 1
          %s184 = sshll.u32 %s183, 4
          %185 = dma.done [#allocation5], %s184
        $region32: #{tpu_custom_call.1} parent=23 // pred_fallthru
          _
        // Predicated region
        $region37: #{tpu_custom_call.1} parent=23 // pred_check
          %p186 = pneg %p166
        $region38: #{tpu_custom_call.1} parent=23 // pred_check_branch
          %188 = sbr.rel (%p186) target = $region40
        $region39: #{tpu_custom_call.1} parent=23 // pred_region
          %189 = vst [vmem:[#allocation4] sm:$0xff] 0.0
          %190 = vst [vmem:[#allocation4 + $0x8] sm:$0xff] 0.0
          %191 = vst [vmem:[#allocation4 + $0x10] sm:$0xff] 0.0
          %192 = vst [vmem:[#allocation4 + $0x18] sm:$0xff] 0.0
          %193 = vst [vmem:[#allocation4 + $0x20] sm:$0xff] 0.0
          %194 = vst [vmem:[#allocation4 + $0x28] sm:$0xff] 0.0
          %195 = vst [vmem:[#allocation4 + $0x30] sm:$0xff] 0.0
          %196 = vst [vmem:[#allocation4 + $0x38] sm:$0xff] 0.0
          %197 = vst [vmem:[#allocation4 + $0x40] sm:$0xff] 0.0
          %198 = vst [vmem:[#allocation4 + $0x48] sm:$0xff] 0.0
          %199 = vst [vmem:[#allocation4 + $0x50] sm:$0xff] 0.0
          %200 = vst [vmem:[#allocation4 + $0x58] sm:$0xff] 0.0
          %201 = vst [vmem:[#allocation4 + $0x60] sm:$0xff] 0.0
          %202 = vst [vmem:[#allocation4 + $0x68] sm:$0xff] 0.0
          %203 = vst [vmem:[#allocation4 + $0x70] sm:$0xff] 0.0
          %204 = vst [vmem:[#allocation4 + $0x78] sm:$0xff] 0.0
        $region40: #{tpu_custom_call.1} parent=23 // pred_fallthru
          _
        %p205 = scmp.lt.s32.totalorder %s24, 0
        %s206 = ssub.s32 0, %s24
        %s207 = scalar_select %p205, %s206, %s24
        %s208 = sand.u32 %s207, 1
        %s209 = ssub.s32 0, %s208
        %s210 = scalar_select %p205, %s209, %s208
        %p211 = scmp.lt.s32.totalorder %s25, 2
        %s212 = scalar_select %p211, 256, 0
        %s213 = smul.u32 %s26, 128
        %s214 = sadd.s32 %s212, %s213
        %p215 = scmp.lt.s32.totalorder %s214, 384
        %s216 = scalar_select %p215, %s214, 384
        %s217 = smul.u32 %s210, 512
        %s218 = sadd.s32 %s217, %s216
        %s219 = sshra.s32 %s218, 3
        %s220 = sand.u32 %s218, 7
        %s221 = smul.addr %s219, 4
        %s222 = scalar_lea.vmem [#allocation2], %s221
        %v223 = vld [vmem:[%s222] sm:$0xf]
        %v224 = vld [vmem:[%s222 + $0x4] sm:$0xf]
        %v225 = vld [vmem:[%s222 + $0x8] sm:$0xf]
        %v226 = vld [vmem:[%s222 + $0xc] sm:$0xf]
        %v227 = vld [vmem:[%s222 + $0x10] sm:$0xf]
        %v228 = vld [vmem:[%s222 + $0x14] sm:$0xf]
        %v229 = vld [vmem:[%s222 + $0x18] sm:$0xf]
        %v230 = vld [vmem:[%s222 + $0x1c] sm:$0xf]
        %v231 = vld [vmem:[%s222 + $0x20] sm:$0xf]
        %v232 = vld [vmem:[%s222 + $0x24] sm:$0xf]
        %v233 = vld [vmem:[%s222 + $0x28] sm:$0xf]
        %v234 = vld [vmem:[%s222 + $0x2c] sm:$0xf]
        %v235 = vld [vmem:[%s222 + $0x30] sm:$0xf]
        %v236 = vld [vmem:[%s222 + $0x34] sm:$0xf]
        %v237 = vld [vmem:[%s222 + $0x38] sm:$0xf]
        %v238 = vld [vmem:[%s222 + $0x3c] sm:$0xf]
        %v239 = vld [vmem:[%s140] sm:$0xff]
        %v240 = vld [vmem:[%s140 + $0x8] sm:$0xff]
        %v241 = vld [vmem:[%s140 + $0x10] sm:$0xff]
        %v242 = vld [vmem:[%s140 + $0x18] sm:$0xff]
        %v243 = vunpack.c.l.s8.bf16 %v239
        %v244 = vunpack.c.h.s8.bf16 %v239
        %v245 = vunpack.c.l.s8.bf16 %v240
        %v246 = vunpack.c.h.s8.bf16 %v240
        %v247 = vunpack.c.l.s8.bf16 %v241
        %v248 = vunpack.c.h.s8.bf16 %v241
        %v249 = vunpack.c.l.s8.bf16 %v242
        %v250 = vunpack.c.h.s8.bf16 %v242
        %v251 = vld [vmem:[#allocation4] sm:$0xff]
        %v252 = vld [vmem:[#allocation4 + $0x8] sm:$0xff]
        %v253 = vld [vmem:[#allocation4 + $0x10] sm:$0xff]
        %v254 = vld [vmem:[#allocation4 + $0x18] sm:$0xff]
        %v255 = vld [vmem:[#allocation4 + $0x20] sm:$0xff]
        %v256 = vld [vmem:[#allocation4 + $0x28] sm:$0xff]
        %v257 = vld [vmem:[#allocation4 + $0x30] sm:$0xff]
        %v258 = vld [vmem:[#allocation4 + $0x38] sm:$0xff]
        %v259 = vld [vmem:[#allocation4 + $0x40] sm:$0xff]
        %v260 = vld [vmem:[#allocation4 + $0x48] sm:$0xff]
        %v261 = vld [vmem:[#allocation4 + $0x50] sm:$0xff]
        %v262 = vld [vmem:[#allocation4 + $0x58] sm:$0xff]
        %v263 = vld [vmem:[#allocation4 + $0x60] sm:$0xff]
        %v264 = vld [vmem:[#allocation4 + $0x68] sm:$0xff]
        %v265 = vld [vmem:[#allocation4 + $0x70] sm:$0xff]
        %v266 = vld [vmem:[#allocation4 + $0x78] sm:$0xff]
        %v283 = vunpack.c.l.b16 %v223
        %v284 = vunpack.c.l.b16 %v224
        %v285 = vunpack.c.l.b16 %v225
        %v286 = vunpack.c.l.b16 %v226
        %v287 = vunpack.c.l.b16 %v227
        %v288 = vunpack.c.l.b16 %v228
        %v289 = vunpack.c.l.b16 %v229
        %v290 = vunpack.c.l.b16 %v230
        %v291 = vunpack.c.l.b16 %v231
        %v292 = vunpack.c.l.b16 %v232
        %v293 = vunpack.c.l.b16 %v233
        %v294 = vunpack.c.l.b16 %v234
        %v295 = vunpack.c.l.b16 %v235
        %v296 = vunpack.c.l.b16 %v236
        %v297 = vunpack.c.l.b16 %v237
        %v298 = vunpack.c.l.b16 %v238
        %v299 = vpack.c.b16 %v284, %v283
        %v300 = vpack.c.b16 %v286, %v285
        %v301 = vpack.c.b16 %v288, %v287
        %v302 = vpack.c.b16 %v290, %v289
        %v303 = vpack.c.b16 %v292, %v291
        %v304 = vpack.c.b16 %v294, %v293
        %v305 = vpack.c.b16 %v296, %v295
        %v306 = vpack.c.b16 %v298, %v297
        %315 = vmatprep.subr.bf16.mxu0 0
        %316 = vmatpush1.bf16.msra.mxu0 %v306
        %317 = vmatprep.subr.bf16.mxu0 0
        %318 = vmatpush1.bf16.msra.mxu0 %v305
        %319 = vmatprep.subr.bf16.mxu0 0
        %320 = vmatpush1.bf16.msra.mxu0 %v304
        %321 = vmatprep.subr.bf16.mxu0 0
        %322 = vmatpush1.bf16.msra.mxu0 %v303
        %323 = vmatprep.subr.bf16.mxu0 0
        %324 = vmatpush1.bf16.msra.mxu0 %v302
        %325 = vmatprep.subr.bf16.mxu0 0
        %326 = vmatpush1.bf16.msra.mxu0 %v301
        %327 = vmatprep.subr.bf16.mxu0 0
        %328 = vmatpush1.bf16.msra.mxu0 %v300
        %329 = vmatprep.subr.bf16.mxu0 0
        %330 = vmatpush1.bf16.msra.mxu0 %v299
        %331 = vmatprep.subr.bf16.mxu0 0
        %332 = vmatpush2.bf16.msra.mxu0 0
        %333 = vmatprep.subr.bf16.mxu0 0
        %334 = vmatpush2.bf16.msra.mxu0 0
        %335 = vmatprep.subr.bf16.mxu0 0
        %336 = vmatpush2.bf16.msra.mxu0 0
        %337 = vmatprep.subr.bf16.mxu0 0
        %338 = vmatpush2.bf16.msra.mxu0 0
        %339 = vmatprep.subr.bf16.mxu0 0
        %340 = vmatpush2.bf16.msra.mxu0 0
        %341 = vmatprep.subr.bf16.mxu0 0
        %342 = vmatpush2.bf16.msra.mxu0 0
        %343 = vmatprep.subr.bf16.mxu0 0
        %344 = vmatpush2.bf16.msra.mxu0 0
        %345 = vmatprep.subr.bf16.mxu0 0
        %346 = vmatpush2.bf16.msra.mxu0 0
        %347 = vmatprep.mubr.bf16.mxu0 0
        %348 = vmatmul.mubr.bf16.gmra.mxu0 %v243
        %v349 = vpop.f32.mrf.mxu0
        %v350 = vadd.f32 0.0, %v349
        %v351 = vpop.f32.mrf.mxu0
        %v352 = vpop.f32.mrf.mxu0
        %v353 = vadd.f32 0.0, %v352
        %v354 = vpop.f32.mrf.mxu0
        %355 = vmatprep.mubr.bf16.mxu0 0
        %356 = vmatmul.mubr.bf16.gmra.mxu0 %v244
        %v357 = vpop.f32.mrf.mxu0
        %v358 = vadd.f32 0.0, %v357
        %v359 = vpop.f32.mrf.mxu0
        %v360 = vpop.f32.mrf.mxu0
        %v361 = vadd.f32 0.0, %v360
        %v362 = vpop.f32.mrf.mxu0
        %363 = vmatprep.mubr.bf16.mxu0 0
        %364 = vmatmul.mubr.bf16.gmra.mxu0 %v245
        %v365 = vpop.f32.mrf.mxu0
        %v366 = vadd.f32 0.0, %v365
        %v367 = vpop.f32.mrf.mxu0
        %v368 = vpop.f32.mrf.mxu0
        %v369 = vadd.f32 0.0, %v368
        %v370 = vpop.f32.mrf.mxu0
        %371 = vmatprep.mubr.bf16.mxu0 0
        %372 = vmatmul.mubr.bf16.gmra.mxu0 %v246
        %v373 = vpop.f32.mrf.mxu0
        %v374 = vadd.f32 0.0, %v373
        %v375 = vpop.f32.mrf.mxu0
        %v376 = vpop.f32.mrf.mxu0
        %v377 = vadd.f32 0.0, %v376
        %v378 = vpop.f32.mrf.mxu0
        %379 = vmatprep.mubr.bf16.mxu0 0
        %380 = vmatmul.mubr.bf16.gmra.mxu0 %v247
        %v381 = vpop.f32.mrf.mxu0
        %v382 = vadd.f32 0.0, %v381
        %v383 = vpop.f32.mrf.mxu0
        %v384 = vpop.f32.mrf.mxu0
        %v385 = vadd.f32 0.0, %v384
        %v386 = vpop.f32.mrf.mxu0
        %387 = vmatprep.mubr.bf16.mxu0 0
        %388 = vmatmul.mubr.bf16.gmra.mxu0 %v248
        %v389 = vpop.f32.mrf.mxu0
        %v390 = vadd.f32 0.0, %v389
        %v391 = vpop.f32.mrf.mxu0
        %v392 = vpop.f32.mrf.mxu0
        %v393 = vadd.f32 0.0, %v392
        %v394 = vpop.f32.mrf.mxu0
        %395 = vmatprep.mubr.bf16.mxu0 0
        %396 = vmatmul.mubr.bf16.gmra.mxu0 %v249
        %v397 = vpop.f32.mrf.mxu0
        %v398 = vadd.f32 0.0, %v397
        %v399 = vpop.f32.mrf.mxu0
        %v400 = vpop.f32.mrf.mxu0
        %v401 = vadd.f32 0.0, %v400
        %v402 = vpop.f32.mrf.mxu0
        %403 = vmatprep.mubr.bf16.mxu0 0
        %404 = vmatmul.mubr.bf16.gmra.mxu0 %v250
        %v405 = vpop.f32.mrf.mxu0
        %v406 = vadd.f32 0.0, %v405
        %v407 = vpop.f32.mrf.mxu0
        %v408 = vpop.f32.mrf.mxu0
        %v409 = vadd.f32 0.0, %v408
        %v410 = vpop.f32.mrf.mxu0
        %411 = vdwg.mxu0
        %v412 = vadd.f32 %v251, %v350
        %v413 = vadd.f32 %v252, %v353
        %v414 = vadd.f32 %v253, %v358
        %v415 = vadd.f32 %v254, %v361
        %v416 = vadd.f32 %v255, %v366
        %v417 = vadd.f32 %v256, %v369
        %v418 = vadd.f32 %v257, %v374
        %v419 = vadd.f32 %v258, %v377
        %v420 = vadd.f32 %v259, %v382
        %v421 = vadd.f32 %v260, %v385
        %v422 = vadd.f32 %v261, %v390
        %v423 = vadd.f32 %v262, %v393
        %v424 = vadd.f32 %v263, %v398
        %v425 = vadd.f32 %v264, %v401
        %v426 = vadd.f32 %v265, %v406
        %v427 = vadd.f32 %v266, %v409
        %428 = vst [vmem:[#allocation4] sm:$0xff] %v412
        %429 = vst [vmem:[#allocation4 + $0x8] sm:$0xff] %v413
        %430 = vst [vmem:[#allocation4 + $0x10] sm:$0xff] %v414
        %431 = vst [vmem:[#allocation4 + $0x18] sm:$0xff] %v415
        %432 = vst [vmem:[#allocation4 + $0x20] sm:$0xff] %v416
        %433 = vst [vmem:[#allocation4 + $0x28] sm:$0xff] %v417
        %434 = vst [vmem:[#allocation4 + $0x30] sm:$0xff] %v418
        %435 = vst [vmem:[#allocation4 + $0x38] sm:$0xff] %v419
        %436 = vst [vmem:[#allocation4 + $0x40] sm:$0xff] %v420
        %437 = vst [vmem:[#allocation4 + $0x48] sm:$0xff] %v421
        %438 = vst [vmem:[#allocation4 + $0x50] sm:$0xff] %v422
        %439 = vst [vmem:[#allocation4 + $0x58] sm:$0xff] %v423
        %440 = vst [vmem:[#allocation4 + $0x60] sm:$0xff] %v424
        %441 = vst [vmem:[#allocation4 + $0x68] sm:$0xff] %v425
        %442 = vst [vmem:[#allocation4 + $0x70] sm:$0xff] %v426
        %443 = vst [vmem:[#allocation4 + $0x78] sm:$0xff] %v427
        %p444 = scmp.eq.s32.totalorder %s26, 1
        // Predicated region
        $region41: #{tpu_custom_call.1} parent=23 // pred_check
          %p445 = pneg %p444
        $region42: #{tpu_custom_call.1} parent=23 // pred_check_branch
          %447 = sbr.rel (%p445) target = $region44
        $region43: #{tpu_custom_call.1} parent=23 // pred_region
          %v448 = vld [vmem:[#allocation4] sm:$0xff]
          %v449 = vld [vmem:[#allocation4 + $0x8] sm:$0xff]
          %v450 = vld [vmem:[#allocation4 + $0x10] sm:$0xff]
          %v451 = vld [vmem:[#allocation4 + $0x18] sm:$0xff]
          %v452 = vld [vmem:[#allocation4 + $0x20] sm:$0xff]
          %v453 = vld [vmem:[#allocation4 + $0x28] sm:$0xff]
          %v454 = vld [vmem:[#allocation4 + $0x30] sm:$0xff]
          %v455 = vld [vmem:[#allocation4 + $0x38] sm:$0xff]
          %v456 = vld [vmem:[#allocation4 + $0x40] sm:$0xff]
          %v457 = vld [vmem:[#allocation4 + $0x48] sm:$0xff]
          %v458 = vld [vmem:[#allocation4 + $0x50] sm:$0xff]
          %v459 = vld [vmem:[#allocation4 + $0x58] sm:$0xff]
          %v460 = vld [vmem:[#allocation4 + $0x60] sm:$0xff]
          %v461 = vld [vmem:[#allocation4 + $0x68] sm:$0xff]
          %v462 = vld [vmem:[#allocation4 + $0x70] sm:$0xff]
          %v463 = vld [vmem:[#allocation4 + $0x78] sm:$0xff]
          %v464 = vmul.f32 %v448, 0.003937008
          %v465 = vmul.f32 %v449, 0.003937008
          %v466 = vmul.f32 %v450, 0.003937008
          %v467 = vmul.f32 %v451, 0.003937008
          %v468 = vmul.f32 %v452, 0.003937008
          %v469 = vmul.f32 %v453, 0.003937008
          %v470 = vmul.f32 %v454, 0.003937008
          %v471 = vmul.f32 %v455, 0.003937008
          %v472 = vmul.f32 %v456, 0.003937008
          %v473 = vmul.f32 %v457, 0.003937008
          %v474 = vmul.f32 %v458, 0.003937008
          %v475 = vmul.f32 %v459, 0.003937008
          %v476 = vmul.f32 %v460, 0.003937008
          %v477 = vmul.f32 %v461, 0.003937008
          %v478 = vmul.f32 %v462, 0.003937008
          %v479 = vmul.f32 %v463, 0.003937008
          %s480 = smul.u32 %s25, 128
          %s481 = ssub.s32 1, %s210
          %s482 = smul.u32 %s481, 512
          %s483 = sadd.s32 %s482, %s480
          %v484 = vpack.c.bf16 %v465, %v464
          %v485 = vpack.c.bf16 %v467, %v466
          %v486 = vpack.c.bf16 %v469, %v468
          %v487 = vpack.c.bf16 %v471, %v470
          %v488 = vpack.c.bf16 %v473, %v472
          %v489 = vpack.c.bf16 %v475, %v474
          %v490 = vpack.c.bf16 %v477, %v476
          %v491 = vpack.c.bf16 %v479, %v478
          %v500 = vunpack.c.l.b16 %v484
          %v501 = vunpack.c.h.b16 %v484
          %v502 = vunpack.c.l.b16 %v485
          %v503 = vunpack.c.h.b16 %v485
          %v504 = vunpack.c.l.b16 %v486
          %v505 = vunpack.c.h.b16 %v486
          %v506 = vunpack.c.l.b16 %v487
          %v507 = vunpack.c.h.b16 %v487
          %v508 = vunpack.c.l.b16 %v488
          %v509 = vunpack.c.h.b16 %v488
          %v510 = vunpack.c.l.b16 %v489
          %v511 = vunpack.c.h.b16 %v489
          %v512 = vunpack.c.l.b16 %v490
          %v513 = vunpack.c.h.b16 %v490
          %v514 = vunpack.c.l.b16 %v491
          %v515 = vunpack.c.h.b16 %v491
          %v516 = vpack.c.b16 %v500, %v500
          %v517 = vpack.c.b16 %v501, %v501
          %v518 = vpack.c.b16 %v502, %v502
          %v519 = vpack.c.b16 %v503, %v503
          %v520 = vpack.c.b16 %v504, %v504
          %v521 = vpack.c.b16 %v505, %v505
          %v522 = vpack.c.b16 %v506, %v506
          %v523 = vpack.c.b16 %v507, %v507
          %v524 = vpack.c.b16 %v508, %v508
          %v525 = vpack.c.b16 %v509, %v509
          %v526 = vpack.c.b16 %v510, %v510
          %v527 = vpack.c.b16 %v511, %v511
          %v528 = vpack.c.b16 %v512, %v512
          %v529 = vpack.c.b16 %v513, %v513
          %v530 = vpack.c.b16 %v514, %v514
          %v531 = vpack.c.b16 %v515, %v515
          %s548 = sshra.s32 %s483, 3
          %s549 = sand.u32 %s483, 7
          %s550 = smul.addr %s548, 4
          %s551 = scalar_lea.vmem [#allocation2], %s550
          %552 = vst [vmem:[%s551] sm:$0xf] %v516
          %553 = vst [vmem:[%s551 + $0x4] sm:$0xf] %v517
          %554 = vst [vmem:[%s551 + $0x8] sm:$0xf] %v518
          %555 = vst [vmem:[%s551 + $0xc] sm:$0xf] %v519
          %556 = vst [vmem:[%s551 + $0x10] sm:$0xf] %v520
          %557 = vst [vmem:[%s551 + $0x14] sm:$0xf] %v521
          %558 = vst [vmem:[%s551 + $0x18] sm:$0xf] %v522
          %559 = vst [vmem:[%s551 + $0x1c] sm:$0xf] %v523
          %560 = vst [vmem:[%s551 + $0x20] sm:$0xf] %v524
          %561 = vst [vmem:[%s551 + $0x24] sm:$0xf] %v525
          %562 = vst [vmem:[%s551 + $0x28] sm:$0xf] %v526
          %563 = vst [vmem:[%s551 + $0x2c] sm:$0xf] %v527
          %564 = vst [vmem:[%s551 + $0x30] sm:$0xf] %v528
          %565 = vst [vmem:[%s551 + $0x34] sm:$0xf] %v529
          %566 = vst [vmem:[%s551 + $0x38] sm:$0xf] %v530
          %567 = vst [vmem:[%s551 + $0x3c] sm:$0xf] %v531
          %s568 = scalar_lea.vmem [#allocation3], %s480
          %v569 = vld [vmem:[%s568] sm:$0xff]
          %v570 = vld [vmem:[%s568 + $0x8] sm:$0xff]
          %v571 = vld [vmem:[%s568 + $0x10] sm:$0xff]
          %v572 = vld [vmem:[%s568 + $0x18] sm:$0xff]
          %v573 = vld [vmem:[%s568 + $0x20] sm:$0xff]
          %v574 = vld [vmem:[%s568 + $0x28] sm:$0xff]
          %v575 = vld [vmem:[%s568 + $0x30] sm:$0xff]
          %v576 = vld [vmem:[%s568 + $0x38] sm:$0xff]
          %v577 = vld [vmem:[%s568 + $0x40] sm:$0xff]
          %v578 = vld [vmem:[%s568 + $0x48] sm:$0xff]
          %v579 = vld [vmem:[%s568 + $0x50] sm:$0xff]
          %v580 = vld [vmem:[%s568 + $0x58] sm:$0xff]
          %v581 = vld [vmem:[%s568 + $0x60] sm:$0xff]
          %v582 = vld [vmem:[%s568 + $0x68] sm:$0xff]
          %v583 = vld [vmem:[%s568 + $0x70] sm:$0xff]
          %v584 = vld [vmem:[%s568 + $0x78] sm:$0xff]
          %v585 = vadd.f32 %v569, %v464
          %v586 = vadd.f32 %v570, %v465
          %v587 = vadd.f32 %v571, %v466
          %v588 = vadd.f32 %v572, %v467
          %v589 = vadd.f32 %v573, %v468
          %v590 = vadd.f32 %v574, %v469
          %v591 = vadd.f32 %v575, %v470
          %v592 = vadd.f32 %v576, %v471
          %v593 = vadd.f32 %v577, %v472
          %v594 = vadd.f32 %v578, %v473
          %v595 = vadd.f32 %v579, %v474
          %v596 = vadd.f32 %v580, %v475
          %v597 = vadd.f32 %v581, %v476
          %v598 = vadd.f32 %v582, %v477
          %v599 = vadd.f32 %v583, %v478
          %v600 = vadd.f32 %v584, %v479
          %s601 = scalar_select %p162, 1, 0
          %v602 = vstv %s601
          %vm603 = vcmp.eq.s32.totalorder %v602, 1
          %v604 = vsel %vm603, %v464, %v585
          %v605 = vsel %vm603, %v465, %v586
          %v606 = vsel %vm603, %v466, %v587
          %v607 = vsel %vm603, %v467, %v588
          %v608 = vsel %vm603, %v468, %v589
          %v609 = vsel %vm603, %v469, %v590
          %v610 = vsel %vm603, %v470, %v591
          %v611 = vsel %vm603, %v471, %v592
          %v612 = vsel %vm603, %v472, %v593
          %v613 = vsel %vm603, %v473, %v594
          %v614 = vsel %vm603, %v474, %v595
          %v615 = vsel %vm603, %v475, %v596
          %v616 = vsel %vm603, %v476, %v597
          %v617 = vsel %vm603, %v477, %v598
          %v618 = vsel %vm603, %v478, %v599
          %v619 = vsel %vm603, %v479, %v600
          %620 = vst [vmem:[%s568] sm:$0xff] %v604
          %621 = vst [vmem:[%s568 + $0x8] sm:$0xff] %v605
          %622 = vst [vmem:[%s568 + $0x10] sm:$0xff] %v606
          %623 = vst [vmem:[%s568 + $0x18] sm:$0xff] %v607
          %624 = vst [vmem:[%s568 + $0x20] sm:$0xff] %v608
          %625 = vst [vmem:[%s568 + $0x28] sm:$0xff] %v609
          %626 = vst [vmem:[%s568 + $0x30] sm:$0xff] %v610
          %627 = vst [vmem:[%s568 + $0x38] sm:$0xff] %v611
          %628 = vst [vmem:[%s568 + $0x40] sm:$0xff] %v612
          %629 = vst [vmem:[%s568 + $0x48] sm:$0xff] %v613
          %630 = vst [vmem:[%s568 + $0x50] sm:$0xff] %v614
          %631 = vst [vmem:[%s568 + $0x58] sm:$0xff] %v615
          %632 = vst [vmem:[%s568 + $0x60] sm:$0xff] %v616
          %633 = vst [vmem:[%s568 + $0x68] sm:$0xff] %v617
          %634 = vst [vmem:[%s568 + $0x70] sm:$0xff] %v618
          %635 = vst [vmem:[%s568 + $0x78] sm:$0xff] %v619
        $region44: #{tpu_custom_call.1} parent=23 // pred_fallthru
          _
        %p636 = scmp.eq.s32.totalorder %s24, 2
        %p637 = pnand %p444, %p636
        %p638 = pneg %p637
        // Predicated region
        $region45: #{tpu_custom_call.1} parent=23 // pred_check
          _
        $region46: #{tpu_custom_call.1} parent=23 // pred_check_branch
          %640 = sbr.rel (%p637) target = $region48
        $region47: #{tpu_custom_call.1} parent=23 // pred_region
          %s641 = smul.u32 %s25, 128
          %s642 = scalar_lea.vmem [#allocation3], %s641
          %v643 = vld [vmem:[%s642] sm:$0xff]
          %v644 = vld [vmem:[%s642 + $0x8] sm:$0xff]
          %v645 = vld [vmem:[%s642 + $0x10] sm:$0xff]
          %v646 = vld [vmem:[%s642 + $0x18] sm:$0xff]
          %v647 = vld [vmem:[%s642 + $0x20] sm:$0xff]
          %v648 = vld [vmem:[%s642 + $0x28] sm:$0xff]
          %v649 = vld [vmem:[%s642 + $0x30] sm:$0xff]
          %v650 = vld [vmem:[%s642 + $0x38] sm:$0xff]
          %v651 = vld [vmem:[%s642 + $0x40] sm:$0xff]
          %v652 = vld [vmem:[%s642 + $0x48] sm:$0xff]
          %v653 = vld [vmem:[%s642 + $0x50] sm:$0xff]
          %v654 = vld [vmem:[%s642 + $0x58] sm:$0xff]
          %v655 = vld [vmem:[%s642 + $0x60] sm:$0xff]
          %v656 = vld [vmem:[%s642 + $0x68] sm:$0xff]
          %v657 = vld [vmem:[%s642 + $0x70] sm:$0xff]
          %v658 = vld [vmem:[%s642 + $0x78] sm:$0xff]
          %v659 = vmul.f32 %v643, 0.25
          %v660 = vmul.f32 %v644, 0.25
          %v661 = vmul.f32 %v645, 0.25
          %v662 = vmul.f32 %v646, 0.25
          %v663 = vmul.f32 %v647, 0.25
          %v664 = vmul.f32 %v648, 0.25
          %v665 = vmul.f32 %v649, 0.25
          %v666 = vmul.f32 %v650, 0.25
          %v667 = vmul.f32 %v651, 0.25
          %v668 = vmul.f32 %v652, 0.25
          %v669 = vmul.f32 %v653, 0.25
          %v670 = vmul.f32 %v654, 0.25
          %v671 = vmul.f32 %v655, 0.25
          %v672 = vmul.f32 %v656, 0.25
          %v673 = vmul.f32 %v657, 0.25
          %v674 = vmul.f32 %v658, 0.25
          %675 = vst [vmem:[%s158] sm:$0xff] %v659
          %676 = vst [vmem:[%s158 + $0x8] sm:$0xff] %v660
          %677 = vst [vmem:[%s158 + $0x10] sm:$0xff] %v661
          %678 = vst [vmem:[%s158 + $0x18] sm:$0xff] %v662
          %679 = vst [vmem:[%s158 + $0x20] sm:$0xff] %v663
          %680 = vst [vmem:[%s158 + $0x28] sm:$0xff] %v664
          %681 = vst [vmem:[%s158 + $0x30] sm:$0xff] %v665
          %682 = vst [vmem:[%s158 + $0x38] sm:$0xff] %v666
          %683 = vst [vmem:[%s158 + $0x40] sm:$0xff] %v667
          %684 = vst [vmem:[%s158 + $0x48] sm:$0xff] %v668
          %685 = vst [vmem:[%s158 + $0x50] sm:$0xff] %v669
          %686 = vst [vmem:[%s158 + $0x58] sm:$0xff] %v670
          %687 = vst [vmem:[%s158 + $0x60] sm:$0xff] %v671
          %688 = vst [vmem:[%s158 + $0x68] sm:$0xff] %v672
          %689 = vst [vmem:[%s158 + $0x70] sm:$0xff] %v673
          %690 = vst [vmem:[%s158 + $0x78] sm:$0xff] %v674
        $region48: #{tpu_custom_call.1} parent=23 // pred_fallthru
          _
        %s691 = sand.u32 %s74, 1
        %s692 = scalar_lea.sflag [#allocation8], %s691
        %s693 = sand.u32 %s74, 1
        %s694 = smul.addr %s693, 128
        %s695 = scalar_lea.vmem [#allocation9], %s694
        // Predicated region
        $region49: #{tpu_custom_call.1} parent=23 // pred_check
          %p696 = pneg %p84
        $region50: #{tpu_custom_call.1} parent=23 // pred_check_branch
          %698 = sbr.rel (%p696) target = $region52
        $region51: #{tpu_custom_call.1} parent=23 // pred_region
          %s699 = smul.u32 16, %s25
          %s701 = ssub.s32 2048, 2048
          %702 = vsyncadd %s692, %s701
          %s703 = smul.addr %s699, 128
          %s704 = scalar_lea.hbm %s2, %s703
          %s705 = sshll.u32 %s695, 4
          %s706 = int_to_ptr.vmem [resolvable:$true] %s705
          %711 = dma.vmem_to_hbm [thread:$0]  %s706, 2048, %s704, %s692, 128, 128, 8
        $region52: #{tpu_custom_call.1} parent=23 // pred_fallthru
          _
      $region24: #{tpu_custom_call.1} parent=5 // pred_fallthru
        _
      %p712 = scmp.le.s32.totalorder 2, %s14
      // Predicated region
      $region53: #{tpu_custom_call.1} parent=5 // pred_check
        %p713 = pneg %p712
      $region54: #{tpu_custom_call.1} parent=5 // pred_check_branch
        %715 = sbr.rel (%p713) target = $region56
      $region55: #{tpu_custom_call.1} parent=5 // pred_region
        %s716 = ssub.s32 %s14, 2
        // Predicated region
        $region57: #{tpu_custom_call.1} parent=55 // pred_check
          %p717 = pneg %p90
        $region58: #{tpu_custom_call.1} parent=55 // pred_check_branch
          %719 = sbr.rel (%p717) target = $region60
        $region59: #{tpu_custom_call.1} parent=55 // pred_region
          %s720 = sand.u32 %s75, 1
          %s721 = scalar_lea.sflag [#allocation8], %s720
          %s722 = sand.u32 %s75, 1
          %s723 = smul.addr %s722, 128
          %s724 = scalar_lea.vmem [#allocation9], %s723
          %725 = dma.done %s721, 2048
        $region60: #{tpu_custom_call.1} parent=55 // pred_fallthru
          _
      $region56: #{tpu_custom_call.1} parent=5 // pred_fallthru
        _
    $region6: #{tpu_custom_call.1} parent=1 // loop_footer
      %s18 = sadd.s32 1, %s14
    $region7: #{tpu_custom_call.1} parent=1 // loop_footer_branch
      %13 = sbr.rel target = $region3
    $region8: #{tpu_custom_call.1} parent=1 // loop_exit
      _
    %726 = vsyncpa [#allocation7], 1
    %s727 = scalar_lea.sflag [#allocation7], 1
    %728 = vsyncpa %s727, 1
    %729 = vsyncpa [#allocation8], 1
    %s730 = scalar_lea.sflag [#allocation8], 1
    %731 = vsyncpa %s730, 1
  %732 = vsyncmov [#allocation5]
  %s733 = vpop.sfrf %732
  %p734 = scmp.eq.s32.totalorder %s733, 0
  %p735 = pneg %p734
  %737 = shalt.err (%p735)

</llo_original>
